<compile_context>
chip_gen: v5e
topology: v5e:2x2
jax: 0.10.0
libtpu: 0.0.40
codegen_flags: <defaults>
</compile_context>

<pallas_src>
import functools

import jax
import jax.numpy as jnp
from jax.experimental import pallas as pl
from jax.experimental.pallas import tpu as pltpu


# ---------------------------------------------------------------------------
# Hardware queries (best effort; conservative fallbacks so this never fails).
# ---------------------------------------------------------------------------

def _vmem_capacity_bytes():
    try:
        return int(pltpu.get_tpu_info().vmem_capacity_bytes)
    except Exception:
        return 64 * 1024 * 1024      # v7x per-TensorCore VMEM (most conservative)


def _num_tensorcores():
    """TensorCores per chip (1 on v5e/v6e, 2 on v7x)."""
    try:
        info = pltpu.get_tpu_info()
        for name in ("tensorcores_per_chip", "num_tensorcores", "cores_per_chip"):
            v = getattr(info, name, None)
            if v:
                return max(1, int(v))
    except Exception:
        pass
    try:
        kind = jax.devices()[0].device_kind.lower()
        if "7" in kind:              # TPU v7x: 2 TensorCores per chip
            return 2
    except Exception:
        pass
    return 1


# ---------------------------------------------------------------------------
# Single-pass kernel: one HBM read + one HBM write of x per block.
# ---------------------------------------------------------------------------

def _se_single_pass_kernel(x_ref, w1t_ref, w2t_ref, o_ref, *, inv_len):
    # x_ref: (tb, C, L)   w1t_ref: (C, Cr)   w2t_ref: (Cr, C)   o_ref: (tb, C, L)
    #
    # NOTE: when B % tb != 0 the trailing rows of the last block contain
    # unspecified data.  Each batch row is computed independently and the
    # out-of-bounds rows of the output store are masked, so NaN/Inf flowing
    # through exp/sigmoid in those dead rows is harmless by design.

    # Squeeze: first streaming pass over the block; f32 accumulation without
    # materializing an f32 copy of x; divide by the true length.
    y = jnp.sum(x_ref[...], axis=-1, dtype=jnp.float32) * inv_len            # (tb, C)

    # Excite: two tiny bias-free linears (weights pre-transposed in wrapper).
    # These are O(B*C*Cr) flops and sit entirely under the DMA time.
    h = jnp.maximum(
        jnp.dot(y, w1t_ref[...], preferred_element_type=jnp.float32), 0.0)   # (tb, Cr)
    s = jax.nn.sigmoid(
        jnp.dot(h, w2t_ref[...], preferred_element_type=jnp.float32))        # (tb, C)

    # Scale: second streaming pass over the block; cast the small gate once.
    o_ref[...] = x_ref[...] * s.astype(o_ref.dtype)[:, :, None]


# ---------------------------------------------------------------------------
# Two-pass fallback kernels (only used when one (C, L) slab won't fit VMEM).
# ---------------------------------------------------------------------------

def _squeeze_excite_kernel(x_ref, w1t_ref, w2t_ref, s_ref, acc_ref, *,
                           inv_len, true_len, chunk):
    # x_ref: (1, C, tl)   s_ref: (B, C) full gate, resident across the grid
    # acc_ref: (1, C) f32 channel-sum accumulator for the current batch row.
    b = pl.program_id(0)
    l = pl.program_id(1)

    @pl.when(l == 0)
    def _():
        acc_ref[...] = jnp.zeros_like(acc_ref)

    x = x_ref[...]
    if true_len % chunk != 0:
        # The last L chunk runs past the array; zero the out-of-bounds lanes so
        # the channel sums stay exact.
        pos = jax.lax.broadcasted_iota(jnp.int32, x.shape, dimension=2) + l * chunk
        x = jnp.where(pos < true_len, x, jnp.zeros_like(x))
    acc_ref[...] += jnp.sum(x, axis=-1, dtype=jnp.float32)

    @pl.when(l == pl.num_programs(1) - 1)
    def _():
        y = acc_ref[...] * inv_len                                           # (1, C)
        h = jnp.maximum(
            jnp.dot(y, w1t_ref[...], preferred_element_type=jnp.float32), 0.0)
        s = jax.nn.sigmoid(
            jnp.dot(h, w2t_ref[...], preferred_element_type=jnp.float32))
        # The gate output block spans the full (B, C) array and stays resident
        # in VMEM for the whole grid; write only this step's batch row.
        s_ref[pl.ds(b, 1), :] = s


def _scale_kernel(x_ref, s_ref, o_ref):
    # x_ref/o_ref: (1, C, tl); s_ref: full (B, C) gate, resident across the grid.
    b = pl.program_id(0)
    s = s_ref[pl.ds(b, 1), :].astype(o_ref.dtype)                            # (1, C)
    o_ref[...] = x_ref[...] * s[:, :, None]


# ---------------------------------------------------------------------------
# Wrappers
# ---------------------------------------------------------------------------

def _choose_batch_tile(B, tb_budget, ncores):
    """Per-step batch tile.  tb_budget = largest tile that fits the VMEM budget."""
    tb_budget = max(1, min(B, tb_budget))
    nb_budget = pl.cdiv(B, tb_budget)
    if ncores <= 1:
        # v5e / v6e: one TensorCore, the grid is a serial loop.  Keep the
        # budget-sized tile; only split enough (>= 2 steps) so the warm-up DMA
        # and final writeback overlap neighbouring blocks.
        nb = max(nb_budget, min(B, 2))
    else:
        # v7x: >= 2 blocks per TensorCore, and (when possible) a block count
        # that is a multiple of the core count so "parallel" shards evenly.
        nb = max(nb_budget, min(B, 2 * ncores))
        if nb % ncores:
            nb = min(B, nb + (ncores - nb % ncores))
    nb = max(1, min(nb, B))
    return pl.cdiv(B, nb)


def _se_block_two_pass(x, w1t, w2t, avail, vmem_cap, chunk):
    """Fallback when one batch row's (C, L) slab doesn't fit the VMEM budget.

    Pass 1 streams x in (1, C, tl) chunks, accumulating channel sums in VMEM
    and emitting the sigmoid gate (B, C) at the last chunk.  Pass 2 streams x
    again and applies the gate.  1.5x the HBM traffic of the single-pass path,
    but it always fits VMEM (important on v7x's 64 MiB per-core VMEM).
    """
    B, C, L = x.shape
    itemsize = jnp.dtype(x.dtype).itemsize
    weight_bytes = w1t.size * w1t.dtype.itemsize + w2t.size * w2t.dtype.itemsize

    # L-chunk sized by pass 2 (x-in + out blocks, double-buffered).  Must be a
    # multiple of 128 unless it covers the whole (possibly ragged) L.
    if chunk is None:
        tl_cap = max(128, (avail // (4 * C * itemsize)) // 128 * 128)
    else:
        tl_cap = max(128, (chunk // 128) * 128)
    tl = L if L <= tl_cap else tl_cap
    nl = pl.cdiv(L, tl)

    gate_bytes = B * C * 4
    vmem_limit = int(min(
        vmem_cap,
        max(4 * C * tl * itemsize + 2 * weight_bytes + gate_bytes
            + 4 * 1024 * 1024,
            16 * 1024 * 1024)))

    # Pass 1: squeeze + excite -> gate (f32).  The gate output block is the
    # whole (B, C) array and is revisited by every grid step, so both grid
    # axes must be "arbitrary".
    squeeze = functools.partial(_squeeze_excite_kernel,
                                inv_len=1.0 / L, true_len=L, chunk=tl)
    gate = pl.pallas_call(
        squeeze,
        out_shape=jax.ShapeDtypeStruct((B, C), jnp.float32),
        grid_spec=pltpu.PrefetchScalarGridSpec(
            num_scalar_prefetch=0,
            grid=(B, nl),
            in_specs=[
                pl.BlockSpec((1, C, tl), lambda b, l: (b, 0, l)),
                pl.BlockSpec(w1t.shape, lambda b, l: (0, 0)),
                pl.BlockSpec(w2t.shape, lambda b, l: (0, 0)),
            ],
            out_specs=pl.BlockSpec((B, C), lambda b, l: (0, 0)),
            scratch_shapes=[pltpu.VMEM((1, C), jnp.float32)],
        ),
        compiler_params=pltpu.CompilerParams(
            dimension_semantics=("arbitrary", "arbitrary"),
            vmem_limit_bytes=vmem_limit,
        ),
    )(x, w1t, w2t)

    # Pass 2: apply the gate, chunk by chunk.  Fully independent blocks.
    return pl.pallas_call(
        _scale_kernel,
        out_shape=jax.ShapeDtypeStruct((B, C, L), x.dtype),
        grid_spec=pltpu.PrefetchScalarGridSpec(
            num_scalar_prefetch=0,
            grid=(B, nl),
            in_specs=[
                pl.BlockSpec((1, C, tl), lambda b, l: (b, 0, l)),
                pl.BlockSpec((B, C), lambda b, l: (0, 0)),
            ],
            out_specs=pl.BlockSpec((1, C, tl), lambda b, l: (b, 0, l)),
        ),
        compiler_params=pltpu.CompilerParams(
            dimension_semantics=("parallel", "parallel"),
            vmem_limit_bytes=vmem_limit,
        ),
    )(x, gate)


def se_block(x, w1, w2, *, force_two_pass=False, two_pass_chunk=None):
    """SE block forward.  x: (B, C, L); w1: (C//r, C); w2: (C, C//r)."""
    B, C, L = x.shape
    itemsize = jnp.dtype(x.dtype).itemsize

    # Pre-transpose the weights once at the JAX level; the MXU consumes the
    # contiguous operand directly (no per-step in-kernel relayout).
    w1t = jnp.asarray(w1).T                                    # (C, Cr)
    w2t = jnp.asarray(w2).T                                    # (Cr, C)
    Cr = w1t.shape[1]
    weight_bytes = (w1t.size * w1t.dtype.itemsize +
                    w2t.size * w2t.dtype.itemsize)

    vmem_cap = _vmem_capacity_bytes()
    ncores = _num_tensorcores()

    # Block-buffer budget: ~3/8 of VMEM (48 MiB on 128 MiB chips, 24 MiB on
    # v7x's 64 MiB per-core VMEM), minus the double-buffered weights.
    budget = (vmem_cap * 3) // 8
    avail = max(budget - 2 * weight_bytes, 256 * 1024)
    per_row = 4 * C * L * itemsize       # x-in + out blocks, double-buffered

    if force_two_pass or per_row > avail:
        return _se_block_two_pass(x, w1t, w2t, avail, vmem_cap, two_pass_chunk)

    # ---- Single-pass path: read x from HBM once, write it once. ----
    tb_budget = max(1, min(B, avail // per_row))
    tb = _choose_batch_tile(B, tb_budget, ncores)
    nb = pl.cdiv(B, tb)

    block_bytes = 4 * tb * C * L * itemsize
    vmem_limit = int(min(
        vmem_cap,
        max(block_bytes + 2 * weight_bytes + 4 * 1024 * 1024,
            16 * 1024 * 1024)))

    cost = pl.CostEstimate(
        flops=2 * B * C * L + 4 * B * C * Cr,
        transcendentals=B * C,
        bytes_accessed=2 * B * C * L * itemsize + weight_bytes,
    )

    kernel = functools.partial(_se_single_pass_kernel, inv_len=1.0 / L)
    return pl.pallas_call(
        kernel,
        out_shape=jax.ShapeDtypeStruct((B, C, L), x.dtype),
        grid_spec=pltpu.PrefetchScalarGridSpec(
            num_scalar_prefetch=0,
            grid=(nb,),
            in_specs=[
                pl.BlockSpec((tb, C, L), lambda b: (b, 0, 0)),
                pl.BlockSpec(w1t.shape, lambda b: (0, 0)),
                pl.BlockSpec(w2t.shape, lambda b: (0, 0)),
            ],
            out_specs=pl.BlockSpec((tb, C, L), lambda b: (b, 0, 0)),
        ),
        compiler_params=pltpu.CompilerParams(
            dimension_semantics=("parallel",),
            vmem_limit_bytes=vmem_limit,
        ),
        cost_estimate=cost,
    )(x, w1t, w2t)


def reference_se_block(x, w1, w2):
    """Pure-JAX reference mirroring the PyTorch module."""
    y = jnp.mean(x, axis=-1)                        # (B, C)
    h = jnp.maximum(y @ w1.T, 0.0)                  # (B, C//r)
    s = jax.nn.sigmoid(h @ w2.T)                    # (B, C)
    return x * s[:, :, None]


if __name__ == "__main__":
    key = jax.random.PRNGKey(0)
    kx, k1, k2, kx2 = jax.random.split(key, 4)

    # Small shapes consistent with the module: (B, C, L) = (2, 8, 16), r=4.
    B, C, L, reduction = 2, 8, 16, 4
    Cr = C // reduction

    x = jax.random.normal(kx, (B, C, L), dtype=jnp.float32)
    # nn.Linear weight shapes are (out_features, in_features); no bias.
    w1 = jax.random.normal(k1, (Cr, C), dtype=jnp.float32) * (1.0 / jnp.sqrt(C))
    w2 = jax.random.normal(k2, (C, Cr), dtype=jnp.float32) * (1.0 / jnp.sqrt(Cr))

    ref = reference_se_block(x, w1, w2)
    out = jax.block_until_ready(se_block(x, w1, w2))
    assert out.shape == (B, C, L)
    assert jnp.allclose(out, ref, atol=1e-5, rtol=1e-5), "single-pass mismatch"

    # Smoke-test the large-shape fallback: forced two-pass path with a chunked,
    # ragged L (200 -> chunks of 128, masked tail) and an odd batch.
    x2 = jax.random.normal(kx2, (3, C, 200), dtype=jnp.float32)
    ref2 = reference_se_block(x2, w1, w2)
    out2 = jax.block_until_ready(
        se_block(x2, w1, w2, force_two_pass=True, two_pass_chunk=128))
    assert out2.shape == x2.shape
    assert jnp.allclose(out2, ref2, atol=1e-5, rtol=1e-5), "two-pass mismatch"

    print("KERNEL_OK")
</pallas_src>

<mosaic_0001>
module attributes {stable_mosaic.version = 11 : i64} {
  func.func @_se_single_pass_kernel(%arg0: i32, %arg1: memref<1x8x16xf32, #tpu.memory_space<vmem>>, %arg2: memref<8x2xf32, #tpu.memory_space<vmem>>, %arg3: memref<2x8xf32, #tpu.memory_space<vmem>>, %arg4: memref<1x8x16xf32, #tpu.memory_space<vmem>>) attributes {dimension_semantics = [#tpu.dimension_semantics<parallel>], iteration_bounds = array<i64: 2>, scalar_prefetch = 0 : i64, scratch_operands = 0 : i64, tpu.core_type = #tpu.core_type<tc>, window_params = [{transform_indices = @transform_0, window_bounds = array<i64: 1, 8, 16>}, {pipeline_mode = #tpu.pipeline_mode<synchronous>, transform_indices = @transform_1, window_bounds = array<i64: 8, 2>}, {pipeline_mode = #tpu.pipeline_mode<synchronous>, transform_indices = @transform_2, window_bounds = array<i64: 2, 8>}, {transform_indices = @transform_3, window_bounds = array<i64: 1, 8, 16>}]} {
    %c0 = arith.constant 0 : index
    %c0_0 = arith.constant 0 : index
    %c0_1 = arith.constant 0 : index
    %0 = vector.load %arg1[%c0, %c0_0, %c0_1] : memref<1x8x16xf32, #tpu.memory_space<vmem>>, vector<1x8x16xf32>
    %cst = arith.constant dense<0.000000e+00> : vector<1x8xf32>
    %1 = vector.multi_reduction <add>, %0, %cst [2] : vector<1x8x16xf32> to vector<1x8xf32>
    %cst_2 = arith.constant 6.250000e-02 : f32
    %2 = vector.broadcast %cst_2 : f32 to vector<1x8xf32>
    %3 = arith.mulf %1, %2 : vector<1x8xf32>
    %c0_3 = arith.constant 0 : index
    %c0_4 = arith.constant 0 : index
    %4 = vector.load %arg2[%c0_3, %c0_4] : memref<8x2xf32, #tpu.memory_space<vmem>>, vector<8x2xf32>
    %cst_5 = arith.constant dense<0.000000e+00> : vector<1x2xf32>
    %5 = tpu.matmul %3, %4, %cst_5 {dimension_numbers = #tpu.dot_dimension_numbers<[1], [0], [0], [1], [0, 0, 1, 1], [], []>} : vector<1x8xf32>, vector<8x2xf32>, vector<1x2xf32> -> vector<1x2xf32>
    %cst_6 = arith.constant 0.000000e+00 : f32
    %6 = vector.broadcast %cst_6 : f32 to vector<1x2xf32>
    %7 = arith.maximumf %5, %6 : vector<1x2xf32>
    %c0_7 = arith.constant 0 : index
    %c0_8 = arith.constant 0 : index
    %8 = vector.load %arg3[%c0_7, %c0_8] : memref<2x8xf32, #tpu.memory_space<vmem>>, vector<2x8xf32>
    %cst_9 = arith.constant dense<0.000000e+00> : vector<1x8xf32>
    %9 = tpu.matmul %7, %8, %cst_9 {dimension_numbers = #tpu.dot_dimension_numbers<[1], [0], [0], [1], [0, 0, 1, 1], [], []>} : vector<1x2xf32>, vector<2x8xf32>, vector<1x8xf32> -> vector<1x8xf32>
    %10 = arith.negf %9 : vector<1x8xf32>
    %11 = math.exp %10 : vector<1x8xf32>
    %cst_10 = arith.constant 1.000000e+00 : f32
    %12 = vector.broadcast %cst_10 : f32 to vector<1x8xf32>
    %13 = arith.addf %12, %11 : vector<1x8xf32>
    %14 = arith.divf %12, %13 : vector<1x8xf32>
    %c0_11 = arith.constant 0 : index
    %c0_12 = arith.constant 0 : index
    %c0_13 = arith.constant 0 : index
    %15 = vector.load %arg1[%c0_11, %c0_12, %c0_13] : memref<1x8x16xf32, #tpu.memory_space<vmem>>, vector<1x8x16xf32>
    %16 = vector.shape_cast %14 : vector<1x8xf32> to vector<1x8x1xf32>
    %17 = vector.broadcast %16 : vector<1x8x1xf32> to vector<1x8x16xf32>
    %18 = arith.mulf %15, %17 : vector<1x8x16xf32>
    %c0_14 = arith.constant 0 : index
    %c0_15 = arith.constant 0 : index
    %c0_16 = arith.constant 0 : index
    %19 = vector.load %arg4[%c0_14, %c0_15, %c0_16] : memref<1x8x16xf32, #tpu.memory_space<vmem>>, vector<1x8x16xf32>
    tpu.vector_store %arg4[%c0_14, %c0_15, %c0_16], %18 {strides = array<i32>} : memref<1x8x16xf32, #tpu.memory_space<vmem>>, vector<1x8x16xf32>,
    return
  }
  func.func @transform_0(%arg0: i32) -> (i32, i32, i32) {
    %c0_i32 = arith.constant 0 : i32
    %c0_i32_0 = arith.constant 0 : i32
    %c0_i32_1 = arith.constant 0 : i32
    return %arg0, %c0_i32, %c0_i32_0 : i32, i32, i32
  }
  func.func @transform_1(%arg0: i32) -> (i32, i32) {
    %c0_i32 = arith.constant 0 : i32
    %c0_i32_0 = arith.constant 0 : i32
    %c0_i32_1 = arith.constant 0 : i32
    return %c0_i32, %c0_i32_0 : i32, i32
  }
  func.func @transform_2(%arg0: i32) -> (i32, i32) {
    %c0_i32 = arith.constant 0 : i32
    %c0_i32_0 = arith.constant 0 : i32
    %c0_i32_1 = arith.constant 0 : i32
    return %c0_i32, %c0_i32_0 : i32, i32
  }
  func.func @transform_3(%arg0: i32) -> (i32, i32, i32) {
    %c0_i32 = arith.constant 0 : i32
    %c0_i32_0 = arith.constant 0 : i32
    %c0_i32_1 = arith.constant 0 : i32
    return %arg0, %c0_i32, %c0_i32_0 : i32, i32, i32
  }
}

</mosaic_0001>

<llo_original>
// kernel: tpu_custom_call.1
$region0: #{tpu_custom_call.1}
  #allocation0 [shape = 'u32[]', space=smem, size = 0x4, offset = 0x4, fixed_abs, tag = 'smem constant byte address 0x4 - core index']
  #allocation1 [shape = 'u32[72,128]{1,0:T(1,128)}', space=vmem, size = 0x9000, scoped, tag = 'internal scratch']
  %s0 = inlined_call_operand.hbm [shape: f32[2,8,16], index: 0, kind: input, shape index: {}]
  %s1 = inlined_call_operand.vmem [shape: f32[8,2], index: 1, kind: input, shape index: {}]
  %s2 = inlined_call_operand.vmem [shape: f32[2,8], index: 2, kind: input, shape index: {}]
  %s3 = inlined_call_operand.hbm [shape: f32[2,8,16], index: 3, kind: output, shape index: {}]
  %s4 = sld [smem:[#allocation0]]
  $region49: #{tpu_custom_call.1} parent=0
    _
  %s6 = ssub.s32 1, %s4
  %s7 = scalar_select 0, %s6, %s4
  $region1: #{tpu_custom_call.1} parent=0
    #allocation2 [shape = 'u8[8192]{0}', space=vmem, size = 0x2000, scoped, tag = 'input window, operand 0']
    #allocation3 [shape = 's32[2]{0}', space=sflag, size = 0x8, scoped, tag = 'scoped memory for tpu_custom_call.1']
    #allocation4 [shape = 's32[2]{0}', space=sflag, size = 0x8, scoped, tag = 'scoped memory for tpu_custom_call.1']
    #allocation5 [shape = 'u8[8192]{0}', space=vmem, size = 0x2000, scoped, tag = 'output window, operand 0']
    %8 = vsyncpa [#allocation3], 0
    %s9 = scalar_lea.sflag [#allocation3], 1
    %10 = vsyncpa %s9, 0
    %11 = vsyncpa [#allocation4], 0
    %s12 = scalar_lea.sflag [#allocation4], 1
    %13 = vsyncpa %s12, 0
    loop: start=0, step=1, limit=4
    $region2: #{tpu_custom_call.1} parent=1 // loop_pre_header
      _
    $region3: #{tpu_custom_call.1} parent=1 // loop_header
      %s15 = sphi 0, %s19
      %p16 = scmp.ge.s32.totalorder %s15, 4
      %s25 = sphi 0, %s27
      %s28 = sphi 0, %s25
      %s29 = sphi 0, %s28
      %s45 = sphi 0, %s29
      %s49 = sphi 0, %s49
      %s51 = sphi 0, %s49
      %s52 = sphi 0, %s51
      %s66 = sphi 0, %s52
      %s70 = sphi 0, %s70
      %s72 = sphi 0, %s70
      %s73 = sphi 0, %s72
      %s87 = sphi 0, %s73
      %s93 = sphi 0, %s95
      %s96 = sphi 0, %s93
      %s97 = sphi 0, %s96
      %s113 = sphi 0, %s97
    $region4: #{tpu_custom_call.1} parent=1 // loop_header_branch
      %18 = sbr.rel (%p16) target = $region8
    $region5: #{tpu_custom_call.1} parent=1 // loop_body
      %s20 = ssub.s32 %s15, 1
      %s21 = ssub.s32 %s15, 2
      %s22 = sadd.s32 %s15, 1
      %s23 = ssub.s32 %s15, %s22
      %p24 = scmp.eq.s32.totalorder %s23, 0
      %s26 = sadd.s32 %s25, 1
      %s27 = scalar_select %p24, %s25, %s26
      %p30 = pneg %p24
      %p31 = scmp.eq.s32.totalorder %s15, 1
      %p32 = por %p30, %p31
      %p33 = scmp.ne.s32.totalorder %s25, %s28
      %p34 = scmp.eq.s32.totalorder %s15, 0
      %p35 = por %p33, %p34
      %p36 = scmp.ne.s32.totalorder %s25, %s28
      %p37 = scmp.eq.s32.totalorder %s20, 1
      %p38 = por %p36, %p37
      %p39 = scmp.ne.s32.totalorder %s28, %s29
      %p40 = scmp.eq.s32.totalorder %s20, 0
      %p41 = por %p39, %p40
      %p42 = scmp.ne.s32.totalorder %s28, %s29
      %p43 = scmp.eq.s32.totalorder %s21, 1
      %p44 = por %p42, %p43
      %p46 = scmp.ne.s32.totalorder %s29, %s45
      %p47 = scmp.eq.s32.totalorder %s21, 0
      %p48 = por %p46, %p47
      %s50 = sadd.s32 %s49, 1
      %p53 = scmp.eq.s32.totalorder %s15, 1
      %p54 = scmp.ne.s32.totalorder %s49, %s51
      %p55 = scmp.eq.s32.totalorder %s15, 0
      %p56 = por %p54, %p55
      %p57 = scmp.ne.s32.totalorder %s49, %s51
      %p58 = scmp.eq.s32.totalorder %s20, 1
      %p59 = por %p57, %p58
      %p60 = scmp.ne.s32.totalorder %s51, %s52
      %p61 = scmp.eq.s32.totalorder %s20, 0
      %p62 = por %p60, %p61
      %p63 = scmp.ne.s32.totalorder %s51, %s52
      %p64 = scmp.eq.s32.totalorder %s21, 1
      %p65 = por %p63, %p64
      %p67 = scmp.ne.s32.totalorder %s52, %s66
      %p68 = scmp.eq.s32.totalorder %s21, 0
      %p69 = por %p67, %p68
      %s71 = sadd.s32 %s70, 1
      %p74 = scmp.eq.s32.totalorder %s15, 1
      %p75 = scmp.ne.s32.totalorder %s70, %s72
      %p76 = scmp.eq.s32.totalorder %s15, 0
      %p77 = por %p75, %p76
      %p78 = scmp.ne.s32.totalorder %s70, %s72
      %p79 = scmp.eq.s32.totalorder %s20, 1
      %p80 = por %p78, %p79
      %p81 = scmp.ne.s32.totalorder %s72, %s73
      %p82 = scmp.eq.s32.totalorder %s20, 0
      %p83 = por %p81, %p82
      %p84 = scmp.ne.s32.totalorder %s72, %s73
      %p85 = scmp.eq.s32.totalorder %s21, 1
      %p86 = por %p84, %p85
      %p88 = scmp.ne.s32.totalorder %s73, %s87
      %p89 = scmp.eq.s32.totalorder %s21, 0
      %p90 = por %p88, %p89
      %s91 = ssub.s32 %s15, %s22
      %p92 = scmp.eq.s32.totalorder %s91, 0
      %s94 = sadd.s32 %s93, 1
      %s95 = scalar_select %p92, %s93, %s94
      %p98 = pneg %p92
      %p99 = scmp.eq.s32.totalorder %s15, 1
      %p100 = por %p98, %p99
      %p101 = scmp.ne.s32.totalorder %s93, %s96
      %p102 = scmp.eq.s32.totalorder %s15, 0
      %p103 = por %p101, %p102
      %p104 = scmp.ne.s32.totalorder %s93, %s96
      %p105 = scmp.eq.s32.totalorder %s20, 1
      %p106 = por %p104, %p105
      %p107 = scmp.ne.s32.totalorder %s96, %s97
      %p108 = scmp.eq.s32.totalorder %s20, 0
      %p109 = por %p107, %p108
      %p110 = scmp.ne.s32.totalorder %s96, %s97
      %p111 = scmp.eq.s32.totalorder %s21, 1
      %p112 = por %p110, %p111
      %p114 = scmp.ne.s32.totalorder %s97, %s113
      %p115 = scmp.eq.s32.totalorder %s21, 0
      %p116 = por %p114, %p115
      %p117 = scmp.le.s32.totalorder 1, %s15
      %p118 = scmp.lt.s32.totalorder %s15, 3
      %p119 = pnand %p117, %p118
      %p120 = pneg %p119
      // Predicated region
      $region9: #{tpu_custom_call.1} parent=5 // pred_check
        _
      $region10: #{tpu_custom_call.1} parent=5 // pred_check_branch
        %122 = sbr.rel (%p119) target = $region12
      $region11: #{tpu_custom_call.1} parent=5 // pred_region
        %s123 = ssub.s32 %s15, 1
        // Predicated region
        $region13: #{tpu_custom_call.1} parent=11 // pred_check
          %p124 = pneg %p62
        $region14: #{tpu_custom_call.1} parent=11 // pred_check_branch
          %126 = sbr.rel (%p124) target = $region16
        $region15: #{tpu_custom_call.1} parent=11 // pred_region
          _
        $region16: #{tpu_custom_call.1} parent=11 // pred_fallthru
          _
        // Predicated region
        $region17: #{tpu_custom_call.1} parent=11 // pred_check
          %p127 = pneg %p83
        $region18: #{tpu_custom_call.1} parent=11 // pred_check_branch
          %129 = sbr.rel (%p127) target = $region20
        $region19: #{tpu_custom_call.1} parent=11 // pred_region
          _
        $region20: #{tpu_custom_call.1} parent=11 // pred_fallthru
          _
      $region12: #{tpu_custom_call.1} parent=5 // pred_fallthru
        _
      %p130 = scmp.lt.s32.totalorder %s15, 2
      // Predicated region
      $region21: #{tpu_custom_call.1} parent=5 // pred_check
        %p131 = pneg %p130
      $region22: #{tpu_custom_call.1} parent=5 // pred_check_branch
        %133 = sbr.rel (%p131) target = $region24
      $region23: #{tpu_custom_call.1} parent=5 // pred_region
        // Predicated region
        $region25: #{tpu_custom_call.1} parent=23 // pred_check
          %p134 = pneg %p35
        $region26: #{tpu_custom_call.1} parent=23 // pred_check_branch
          %136 = sbr.rel (%p134) target = $region28
        $region27: #{tpu_custom_call.1} parent=23 // pred_region
          %s137 = sand.u32 %s25, 1
          %s138 = scalar_lea.sflag [#allocation3], %s137
          %s139 = sand.u32 %s25, 1
          %s140 = smul.addr %s139, 8
          %s141 = scalar_lea.vmem [#allocation2], %s140
          %143 = vsyncadd %s138, 0
          %s144 = smul.addr %s15, 8
          %s145 = scalar_lea.hbm %s0, %s144
          %s147 = sshll.u32 %s145, 4
          %s148 = int_to_ptr.hbm [resolvable:$true] %s147
          %s149 = sshll.u32 %s141, 4
          %s150 = int_to_ptr.vmem [resolvable:$true] %s149
          %152 = dma.hbm_to_vmem [thread:$0]  %s148, 128, %s150, %s138
        $region28: #{tpu_custom_call.1} parent=23 // pred_fallthru
          _
      $region24: #{tpu_custom_call.1} parent=5 // pred_fallthru
        _
      %p153 = scmp.le.s32.totalorder 1, %s15
      %p154 = scmp.lt.s32.totalorder %s15, 3
      %p155 = pnand %p153, %p154
      %p156 = pneg %p155
      // Predicated region
      $region29: #{tpu_custom_call.1} parent=5 // pred_check
        _
      $region30: #{tpu_custom_call.1} parent=5 // pred_check_branch
        %158 = sbr.rel (%p155) target = $region32
      $region31: #{tpu_custom_call.1} parent=5 // pred_region
        %s159 = ssub.s32 %s15, 1
        %s160 = sand.u32 %s28, 1
        %s161 = scalar_lea.sflag [#allocation3], %s160
        %s162 = sand.u32 %s28, 1
        %s163 = smul.addr %s162, 8
        %s164 = scalar_lea.vmem [#allocation2], %s163
        // Predicated region
        $region33: #{tpu_custom_call.1} parent=31 // pred_check
          %p165 = pneg %p41
        $region34: #{tpu_custom_call.1} parent=31 // pred_check_branch
          %167 = sbr.rel (%p165) target = $region36
        $region35: #{tpu_custom_call.1} parent=31 // pred_region
          %169 = dma.done %s161, 128
        $region36: #{tpu_custom_call.1} parent=31 // pred_fallthru
          _
        %s170 = sand.u32 %s28, 1
        %s171 = scalar_lea.sflag [#allocation3], %s170
        %s172 = sand.u32 %s28, 1
        %s173 = smul.addr %s172, 8
        %s174 = scalar_lea.vmem [#allocation2], %s173
        %p175 = pneg %p41
        %p176 = pneg %p38
        %p177 = pneg %p62
        %p178 = pneg %p59
        %p179 = pneg %p83
        %p180 = pneg %p80
        %p181 = pneg %p109
        %p182 = pneg %p106
        %s183 = sand.u32 %s96, 1
        %s184 = scalar_lea.sflag [#allocation4], %s183
        %s185 = sand.u32 %s96, 1
        %s186 = smul.addr %s185, 8
        %s187 = scalar_lea.vmem [#allocation5], %s186
        %v188 = vld [vmem:[%s164] sm:$0xff]
        %vm189 = vcmask 130048
        %v190 = vsel %vm189, %v188, 0.0
        %191 = vadd.xlane.f32.xlu0 %v190
        %v192 = vpop.xlane.xlu0 %191
        %v193 = vmul.f32 %v192, 0.0625
        %v194 = vld [vmem:[%s1] sm:$0xff]
        %v196 = vlaneseq
        %v197 = vand.u32 %v196, 127
        %v198 = vperm.slane %v193, %v197
        %vm199 = vcmask 64512
        %v200 = vsel %vm199, %v198, 0
        %202 = vmatpush.msra.mxu0 0.0
        %203 = vmatpush.msra.mxu0 0.0
        %204 = vmatpush.msra.mxu0 0.0
        %205 = vmatpush.msra.mxu0 0.0
        %206 = vmatpush.msra.mxu0 0.0
        %207 = vmatpush.msra.mxu0 0.0
        %208 = vmatpush.msra.mxu0 0.0
        %209 = vmatpush.msra.mxu0 0.0
        %210 = vmatpush.msra.mxu0 0.0
        %211 = vmatpush.msra.mxu0 0.0
        %212 = vmatpush.msra.mxu0 0.0
        %213 = vmatpush.msra.mxu0 0.0
        %214 = vmatpush.msra.mxu0 0.0
        %215 = vmatpush.msra.mxu0 0.0
        %216 = vmatpush.msra.mxu0 0.0
        %217 = vmatpush.msra.mxu0 %v194
        %218 = vmatmul.f32.gmra.mxu0 %v200
        %v219 = vpop.f32.mrf.mxu0
        %v220 = vadd.f32 0.0, %v219
        %221 = vdwg.mxu0
        %v222 = vmax.f32 %v220, 0.0
        %v223 = vld [vmem:[%s2] sm:$0x3]
        %vm224 = vcmask 15360
        %v226 = vsel %vm224, %v222, 0
        %vm228 = vcmask 1041408
        %v230 = vsel %vm228, %v223, 0
        %232 = vmatpush.msra.mxu0 0.0
        %233 = vmatpush.msra.mxu0 0.0
        %234 = vmatpush.msra.mxu0 0.0
        %235 = vmatpush.msra.mxu0 0.0
        %236 = vmatpush.msra.mxu0 0.0
        %237 = vmatpush.msra.mxu0 0.0
        %238 = vmatpush.msra.mxu0 0.0
        %239 = vmatpush.msra.mxu0 0.0
        %240 = vmatpush.msra.mxu0 0.0
        %241 = vmatpush.msra.mxu0 0.0
        %242 = vmatpush.msra.mxu0 0.0
        %243 = vmatpush.msra.mxu0 0.0
        %244 = vmatpush.msra.mxu0 0.0
        %245 = vmatpush.msra.mxu0 0.0
        %246 = vmatpush.msra.mxu0 0.0
        %247 = vmatpush.msra.mxu0 %v230
        %248 = vmatmul.f32.gmra.mxu0 %v226
        %v249 = vpop.f32.mrf.mxu0
        %v250 = vadd.f32 0.0, %v249
        %251 = vdwg.mxu0
        %v252 = vxor.u32 %v250, 2147483648
        %v253 = vmul.f32 %v252, 1.442695
        %v254 = vpow.pop %v253
        %v255 = vadd.f32 %v254, 1.0
        %v256 = vrcp.pop %v255
        %v257 = vmul.f32 %v255, %v256
        %v258 = vsub.f32 1.0, %v257
        %v259 = vmul.f32 %v256, %v258
        %v260 = vadd.f32 %v256, %v259
        %vm261 = vweird.f32 %v255
        %vm262 = vweird.f32 %v256
        %vm263 = vmor %vm261, %vm262
        %v264 = vsel %vm263, %v256, %v260
        %v265 = vand.u32 2147483647, %v255
        %vm266 = vcmp.eq.f32.partialorder %v265, 8.507059e+37
        %v267 = vand.u32 %v255, 2147483648
        %v268 = vor.u32 1.1754944e-38, %v267
        %v269 = vsel %vm266, %v268, %v264
        %v270 = vmul.f32 1.0, %v269
        %v271 = vperm.slane %v270, 0
        %v272 = vlaneseq
        %v273 = vshrl.u32 %v272, 7
        %275 = vset.pattern.permute.xlu0 %v273
        %276 = vperm.xlu0 %275, %v271
        %v277 = vpop.permute.xlu0 %276
        %v278 = vmul.f32 %v188, %v277
        %279 = vst.msk [vmem:[%s187] sm:$0xff] %vm189, %v278
        %s280 = sand.u32 %s96, 1
        %s281 = scalar_lea.sflag [#allocation4], %s280
        %s282 = sand.u32 %s96, 1
        %s283 = smul.addr %s282, 8
        %s284 = scalar_lea.vmem [#allocation5], %s283
        // Predicated region
        $region37: #{tpu_custom_call.1} parent=31 // pred_check
          %p285 = pneg %p106
        $region38: #{tpu_custom_call.1} parent=31 // pred_check_branch
          %287 = sbr.rel (%p285) target = $region40
        $region39: #{tpu_custom_call.1} parent=31 // pred_region
          %289 = vsyncadd %s281, 0
          %s290 = smul.addr %s20, 8
          %s291 = scalar_lea.hbm %s3, %s290
          %s293 = sshll.u32 %s284, 4
          %s294 = int_to_ptr.vmem [resolvable:$true] %s293
          %s295 = sshll.u32 %s291, 4
          %s296 = int_to_ptr.hbm [resolvable:$true] %s295
          %298 = dma.vmem_to_hbm [thread:$0]  %s294, 128, %s296, %s281
        $region40: #{tpu_custom_call.1} parent=31 // pred_fallthru
          _
      $region32: #{tpu_custom_call.1} parent=5 // pred_fallthru
        _
      %p299 = scmp.le.s32.totalorder 2, %s15
      // Predicated region
      $region41: #{tpu_custom_call.1} parent=5 // pred_check
        %p300 = pneg %p299
      $region42: #{tpu_custom_call.1} parent=5 // pred_check_branch
        %302 = sbr.rel (%p300) target = $region44
      $region43: #{tpu_custom_call.1} parent=5 // pred_region
        %s303 = ssub.s32 %s15, 2
        // Predicated region
        $region45: #{tpu_custom_call.1} parent=43 // pred_check
          %p304 = pneg %p112
        $region46: #{tpu_custom_call.1} parent=43 // pred_check_branch
          %306 = sbr.rel (%p304) target = $region48
        $region47: #{tpu_custom_call.1} parent=43 // pred_region
          %s307 = sand.u32 %s97, 1
          %s308 = scalar_lea.sflag [#allocation4], %s307
          %s309 = sand.u32 %s97, 1
          %s310 = smul.addr %s309, 8
          %s311 = scalar_lea.vmem [#allocation5], %s310
          %313 = dma.done %s308, 128
        $region48: #{tpu_custom_call.1} parent=43 // pred_fallthru
          _
      $region44: #{tpu_custom_call.1} parent=5 // pred_fallthru
        _
    $region6: #{tpu_custom_call.1} parent=1 // loop_footer
      %s19 = sadd.s32 1, %s15
    $region7: #{tpu_custom_call.1} parent=1 // loop_footer_branch
      %14 = sbr.rel target = $region3
    $region8: #{tpu_custom_call.1} parent=1 // loop_exit
      _
    %314 = vsyncpa [#allocation3], 1
    %s315 = scalar_lea.sflag [#allocation3], 1
    %316 = vsyncpa %s315, 1
    %317 = vsyncpa [#allocation4], 1
    %s318 = scalar_lea.sflag [#allocation4], 1
    %319 = vsyncpa %s318, 1

</llo_original>
